<compile_context>
chip_gen: v6e
topology: v6e:2x2x1
jax: 0.10.0
libtpu: 0.0.40
codegen_flags: <defaults>
</compile_context>

<pallas_src>
import functools
import math

import jax
import jax.numpy as jnp
from jax.experimental import pallas as pl
from jax.experimental.pallas import tpu as pltpu

VMEM = pltpu.MemorySpace.VMEM
BN_EPS = 1e-5


def _vspecs(n):
    return [pl.BlockSpec(memory_space=VMEM) for _ in range(n)]


def _vmem_capacity():
    try:
        return int(pltpu.get_tpu_info().vmem_capacity_bytes)
    except Exception:
        return 64 << 20  # conservative fallback (v7x physical per-core VMEM)


def _choose_row_tile(n, heads, hidden, vmem_cap):
    """Row tile (and padded row count) for the A-streaming kernels.

    Budget: double-buffered bf16 (tm, N) adjacency blocks + resident per-head
    feature slabs must fit well inside scoped VMEM on every generation
    (v5e/v6e: 128 MiB, v7x: 64 MiB).
    """
    resident = n * hidden * (heads + 1) * 2 + n * heads * 4 + (1 << 16)
    budget = max(int(vmem_cap * 0.45) - resident, 1 << 20)
    tm = budget // (4 * n)                 # 2 buffers * 2 bytes * n lanes per row
    tm = max(8, min(1024, (tm // 8) * 8))
    if tm >= n:
        tm = ((n + 7) // 8) * 8            # single (padded) block
    n_pad = ((n + tm - 1) // tm) * tm
    return tm, n_pad


def _pad_rows(x, n_pad):
    n = x.shape[0]
    if n == n_pad:
        return x
    return jnp.pad(x, ((0, n_pad - n),) + ((0, 0),) * (x.ndim - 1))


# --------------------------------------------------------------------------
# Small dense kernels (untiled: everything here is O(N * hidden))
# --------------------------------------------------------------------------

def _linear_kernel(x_ref, w_ref, b_ref, o_ref, *, relu):
    y = jnp.dot(x_ref[...], w_ref[...], preferred_element_type=jnp.float32) + b_ref[...]
    if relu:
        y = jnp.maximum(y, 0.0)
    o_ref[...] = y


def linear(x, p, relu=False):
    kern = functools.partial(_linear_kernel, relu=relu)
    return pl.pallas_call(
        kern,
        out_shape=jax.ShapeDtypeStruct((x.shape[0], p["w"].shape[1]), jnp.float32),
        in_specs=_vspecs(3),
        out_specs=pl.BlockSpec(memory_space=VMEM),
    )(x, p["w"], p["b"])


def _bn_kernel(v_ref, o_ref, *, bn_eps):
    v = v_ref[...]
    mean = jnp.mean(v, axis=0, keepdims=True)
    var = jnp.mean(jnp.square(v - mean), axis=0, keepdims=True)
    o_ref[...] = (v - mean) * jax.lax.rsqrt(var + bn_eps)


def batchnorm(v):
    return pl.pallas_call(
        functools.partial(_bn_kernel, bn_eps=BN_EPS),
        out_shape=jax.ShapeDtypeStruct(v.shape, jnp.float32),
        in_specs=_vspecs(1),
        out_specs=pl.BlockSpec(memory_space=VMEM),
    )(v)


def _hl_prelude_kernel(x_ref, inw_ref, inb_ref, udst_ref, usrc_ref, cdst_ref,
                       csrc_ref, wout_ref, d_ref, sd_ref, sst_ref, dh_ref,
                       *, heads, out_dim):
    # h0 = relu(x @ W_in + b_in)                                (N, heads*D)
    h0 = jnp.maximum(
        jnp.dot(x_ref[...], inw_ref[...], preferred_element_type=jnp.float32)
        + inb_ref[...], 0.0)
    # per-edge gate score splits into dst + src node terms; the per-head att_gate
    # linear is folded into the gate weight vectors at init (u = att_w.T @ g_w).
    sd_ref[...] = (jnp.dot(h0, udst_ref[...], preferred_element_type=jnp.float32)
                   + cdst_ref[...])                              # (N, heads)
    sst_ref[...] = (jax.lax.dot_general(usrc_ref[...], h0, (((0,), (1,)), ((), ())),
                                        preferred_element_type=jnp.float32)
                    + csrc_ref[...])                             # (heads, N)
    # per-head src-degree-scaled features with the hh->hidden out-projection
    # pre-applied:  dh[k] = (d * h0_k) @ Wout_k   (bf16 MXU operand)
    dh0 = d_ref[...] * h0
    for k in range(heads):
        dh_ref[k] = jnp.dot(dh0[:, k * out_dim:(k + 1) * out_dim], wout_ref[k],
                            preferred_element_type=jnp.float32).astype(jnp.bfloat16)


def hl_prelude(x, p, d_col, heads, hidden):
    n = x.shape[0]
    kern = functools.partial(_hl_prelude_kernel, heads=heads, out_dim=hidden)
    return pl.pallas_call(
        kern,
        out_shape=(jax.ShapeDtypeStruct((n, heads), jnp.float32),
                   jax.ShapeDtypeStruct((heads, n), jnp.float32),
                   jax.ShapeDtypeStruct((heads, n, hidden), jnp.bfloat16)),
        in_specs=_vspecs(9),
        out_specs=tuple(_vspecs(3)),
    )(x, p["in"]["w"], p["in"]["b"], p["udst"], p["usrc"], p["cdst"], p["csrc"],
      p["wout"], d_col)


def _gcn_pre_kernel(f_ref, w_ref, d_ref, fw_ref, dfw_ref):
    fw = jnp.dot(f_ref[...], w_ref[...], preferred_element_type=jnp.float32)
    fw_ref[...] = fw
    dfw_ref[...] = (d_ref[...] * fw).astype(jnp.bfloat16)


def gcn_pre(f, p, d_col):
    n = f.shape[0]
    hidden = p["w"].shape[1]
    return pl.pallas_call(
        _gcn_pre_kernel,
        out_shape=(jax.ShapeDtypeStruct((n, hidden), jnp.float32),
                   jax.ShapeDtypeStruct((n, hidden), jnp.bfloat16)),
        in_specs=_vspecs(3),
        out_specs=tuple(_vspecs(2)),
    )(f, p["w"], d_col)


def _decoder_kernel(hg_ref, hc_ref, wg_ref, wc_ref, bz_ref, wx_ref, bx_ref,
                    z_ref, x_ref):
    z = (jnp.dot(hg_ref[...], wg_ref[...], preferred_element_type=jnp.float32)
         + jnp.dot(hc_ref[...], wc_ref[...], preferred_element_type=jnp.float32)
         + bz_ref[...])
    z_ref[...] = z
    x_ref[...] = jnp.dot(z, wx_ref[...], preferred_element_type=jnp.float32) + bx_ref[...]


def decode(h_gat, h_gcn, pz, px):
    n = h_gat.shape[0]
    hidden = pz["wg"].shape[1]
    in_dim = px["w"].shape[1]
    return pl.pallas_call(
        _decoder_kernel,
        out_shape=(jax.ShapeDtypeStruct((n, hidden), jnp.float32),
                   jax.ShapeDtypeStruct((n, in_dim), jnp.float32)),
        in_specs=_vspecs(7),
        out_specs=tuple(_vspecs(2)),
    )(h_gat, h_gcn, pz["wg"], pz["wc"], pz["b"], px["w"], px["b"])


# --------------------------------------------------------------------------
# Row-tiled kernels touching the (N, N) adjacency
# --------------------------------------------------------------------------

def _hl_attend_kernel(a_ref, sd_ref, sst_ref, d_ref, dh_ref, bout_ref, skip_ref,
                      o_ref, *, heads, sign, slope, eps):
    a = a_ref[...]                       # (TM, N) bf16 adjacency rows (read once / all heads)
    sdb = sd_ref[...]                    # (TM, heads) dst gate terms
    ss = sst_ref[...]                    # (heads, N)  src gate terms
    acc = jnp.zeros(o_ref.shape, jnp.float32)
    for k in range(heads):
        hh = sdb[:, k:k + 1] + ss[k:k + 1, :]                     # (TM, N)
        g = jnp.maximum(hh, -slope * hh).astype(jnp.bfloat16)     # leaky-abs gate >= 0
        acc = acc + jnp.dot(a * g, dh_ref[k],                     # (TM, hidden)
                            preferred_element_type=jnp.float32)
    y = sign * d_ref[...] * acc + bout_ref[...]                   # out_linear fused
    o_ref[...] = eps * skip_ref[...] + jnp.maximum(y, 0.0)        # eps*skip + relu fused


def hl_attend(A_pad, sd_pad, sst, d_pad, dh, bout, skip_pad, freq, eps, tm, vmem_limit):
    n_pad, n = A_pad.shape
    heads, _, hidden = dh.shape
    sign = 1.0 if freq == "low" else -1.0
    slope = 0.1 if freq == "low" else 0.5
    kern = functools.partial(_hl_attend_kernel, heads=heads, sign=sign,
                             slope=slope, eps=float(eps))
    cost = pl.CostEstimate(
        flops=int(2 * heads * n_pad * n * hidden + 6 * heads * n_pad * n),
        transcendentals=0,
        bytes_accessed=int(n_pad * n * 2 + heads * n * (hidden * 2 + 4)
                           + n_pad * hidden * 8 + n_pad * (heads + 1) * 4))
    return pl.pallas_call(
        kern,
        out_shape=jax.ShapeDtypeStruct((n_pad, hidden), jnp.float32),
        grid=(n_pad // tm,),
        in_specs=[pl.BlockSpec((tm, n), lambda i: (i, 0)),                # A rows (bf16)
                  pl.BlockSpec((tm, heads), lambda i: (i, 0)),            # dst gate block
                  pl.BlockSpec((heads, n), lambda i: (0, 0)),             # src gate (resident)
                  pl.BlockSpec((tm, 1), lambda i: (i, 0)),                # dst degree block
                  pl.BlockSpec((heads, n, hidden), lambda i: (0, 0, 0)),  # dh (bf16, resident)
                  pl.BlockSpec((1, hidden), lambda i: (0, 0)),            # out bias
                  pl.BlockSpec((tm, hidden), lambda i: (i, 0))],          # skip block
        out_specs=pl.BlockSpec((tm, hidden), lambda i: (i, 0)),
        compiler_params=pltpu.CompilerParams(
            dimension_semantics=("parallel",), vmem_limit_bytes=vmem_limit),
        cost_estimate=cost,
    )(A_pad, sd_pad, sst, d_pad, dh, bout, skip_pad)


def _gcn_prop_kernel(a_ref, dfw_ref, d_ref, fw_ref, b_ref, skip_ref, o_ref,
                     *, low, eps):
    p = jnp.dot(a_ref[...], dfw_ref[...], preferred_element_type=jnp.float32)  # A (D f W)
    d_blk = d_ref[...]
    fw_blk = fw_ref[...]
    if low:
        y = d_blk * (p + d_blk * fw_blk) + b_ref[...]   # D(A+I)D f W + b
    else:
        y = fw_blk - d_blk * p + b_ref[...]             # (I - D A D) f W + b
    o_ref[...] = eps * skip_ref[...] + jnp.maximum(y, 0.0)


def gcn_prop(A_pad, dfw, d_pad, fw_pad, b, skip_pad, freq, eps, tm, vmem_limit):
    n_pad, n = A_pad.shape
    hidden = dfw.shape[1]
    kern = functools.partial(_gcn_prop_kernel, low=(freq == "low"), eps=float(eps))
    cost = pl.CostEstimate(
        flops=int(2 * n_pad * n * hidden),
        transcendentals=0,
        bytes_accessed=int(n_pad * n * 2 + n * hidden * 2 + 3 * n_pad * hidden * 4))
    return pl.pallas_call(
        kern,
        out_shape=jax.ShapeDtypeStruct((n_pad, hidden), jnp.float32),
        grid=(n_pad // tm,),
        in_specs=[pl.BlockSpec((tm, n), lambda i: (i, 0)),          # A rows (bf16)
                  pl.BlockSpec((n, hidden), lambda i: (0, 0)),      # D*f*W (bf16, resident)
                  pl.BlockSpec((tm, 1), lambda i: (i, 0)),          # degree block
                  pl.BlockSpec((tm, hidden), lambda i: (i, 0)),     # f*W block
                  pl.BlockSpec((1, hidden), lambda i: (0, 0)),      # bias
                  pl.BlockSpec((tm, hidden), lambda i: (i, 0))],    # skip block
        out_specs=pl.BlockSpec((tm, hidden), lambda i: (i, 0)),
        compiler_params=pltpu.CompilerParams(
            dimension_semantics=("parallel",), vmem_limit_bytes=vmem_limit),
        cost_estimate=cost,
    )(A_pad, dfw, d_pad, fw_pad, b, skip_pad)


def _sig_gram_kernel(zb_ref, z_ref, o_ref):
    zz = jax.lax.dot_general(zb_ref[...], z_ref[...], (((1,), (1,)), ((), ())),
                             preferred_element_type=jnp.float32)
    o_ref[...] = jax.nn.sigmoid(zz)


def sigmoid_gram(z, tm, n_pad, vmem_limit):
    n, h = z.shape
    z_pad = _pad_rows(z, n_pad)
    cost = pl.CostEstimate(flops=int(2 * n_pad * n * h),
                           transcendentals=int(n_pad * n),
                           bytes_accessed=int(n_pad * n * 4 + (n_pad + n) * h * 4))
    out = pl.pallas_call(
        _sig_gram_kernel,
        out_shape=jax.ShapeDtypeStruct((n_pad, n), jnp.float32),
        grid=(n_pad // tm,),
        in_specs=[pl.BlockSpec((tm, h), lambda i: (i, 0)),
                  pl.BlockSpec((n, h), lambda i: (0, 0))],
        out_specs=pl.BlockSpec((tm, n), lambda i: (i, 0)),
        compiler_params=pltpu.CompilerParams(
            dimension_semantics=("parallel",), vmem_limit_bytes=vmem_limit),
        cost_estimate=cost,
    )(z_pad, z)
    return out[:n]


# --------------------------------------------------------------------------
# Parameter construction (deterministic, xavier-normal-style, pre-folded/stacked)
# --------------------------------------------------------------------------

def _xavier_normal(key, out_f, in_f, gain=1.414):
    std = gain * math.sqrt(2.0 / (in_f + out_f))
    return std * jax.random.normal(key, (out_f, in_f), dtype=jnp.float32)


def init_params(key, in_dim, hidden, heads, enc_layers):
    keys = iter(jax.random.split(key, 4096))

    def lin(in_f, out_f):
        # pre-transposed once: kernels compute x @ w + b with w of shape (in, out)
        return {"w": _xavier_normal(next(keys), out_f, in_f).T,
                "b": jnp.zeros((1, out_f), jnp.float32)}

    def hl_params():
        hh = hidden * heads
        udst = jnp.zeros((hh, heads), jnp.float32)
        usrc = jnp.zeros((hh, heads), jnp.float32)
        for k in range(heads):
            att_w = _xavier_normal(next(keys), hidden, hidden)       # torch (out, in)
            gate_w = _xavier_normal(next(keys), 1, 2 * hidden)[0]    # (2*hidden,)
            # gate(att(h_dst), att(h_src)) = h_dst @ (att_w.T @ g_dst)
            #                              + h_src @ (att_w.T @ g_src)  (+ zero biases)
            udst = udst.at[k * hidden:(k + 1) * hidden, k].set(att_w.T @ gate_w[:hidden])
            usrc = usrc.at[k * hidden:(k + 1) * hidden, k].set(att_w.T @ gate_w[hidden:])
        out_w = _xavier_normal(next(keys), hidden, hh)               # torch (out, in)
        wout = jnp.stack([out_w[:, k * hidden:(k + 1) * hidden].T for k in range(heads)])
        return {"in": lin(hidden, hh),
                "udst": udst, "usrc": usrc,
                "cdst": jnp.zeros((1, heads), jnp.float32),
                "csrc": jnp.zeros((heads, 1), jnp.float32),
                "wout": wout, "bout": jnp.zeros((1, hidden), jnp.float32)}

    def dec_z():
        wz = _xavier_normal(next(keys), hidden, 2 * hidden).T        # (2*hidden, hidden)
        return {"wg": wz[:hidden, :], "wc": wz[hidden:, :],
                "b": jnp.zeros((1, hidden), jnp.float32)}

    return {
        "t1": lin(in_dim, hidden),
        "enc": [{"low": hl_params(), "high": hl_params(), "gcn": lin(hidden, hidden)}
                for _ in range(enc_layers)],
        "dec": {"low": dec_z(), "low_X": lin(hidden, in_dim),
                "high": dec_z(), "high_X": lin(hidden, in_dim)},
    }


# --------------------------------------------------------------------------
# Model forward (glue in JAX, compute in Pallas kernels)
# --------------------------------------------------------------------------

def model_forward(params, A, d, hat_d, feat, eps, heads, hidden):
    n = feat.shape[0]
    vmem_cap = _vmem_capacity()
    tm, n_pad = _choose_row_tile(n, heads, hidden, vmem_cap)
    vmem_limit = max(32 << 20, min(int(vmem_cap * 0.8), 112 << 20))

    A_pad = _pad_rows(A.astype(jnp.bfloat16), n_pad)     # rows padded, lanes = n
    d_col = d.reshape(n, 1)
    hat_d_col = hat_d.reshape(n, 1)
    d_pad = _pad_rows(d_col, n_pad)
    hat_d_pad = _pad_rows(hat_d_col, n_pad)

    h = linear(feat, params["t1"], relu=True)             # (N, hidden) skip connection
    skip_pad = _pad_rows(h, n_pad)

    h_gat = {"low": h, "high": h}
    h_gcn = {"low": h, "high": h}

    for layer in params["enc"]:
        for freq in ("low", "high"):
            # --- HL / GAT branch: prelude (gate terms + projected per-head features),
            #     then ONE row-tiled pass over A with heads as an inner loop.
            p = layer[freq]
            sd, sst, dh = hl_prelude(h_gat[freq], p, d_col, heads, hidden)
            v = hl_attend(A_pad, _pad_rows(sd, n_pad), sst, d_pad, dh,
                          p["bout"], skip_pad, freq, eps, tm, vmem_limit)
            h_gat[freq] = batchnorm(v[:n])

            # --- shared GCN branch (weights shared between low/high, as in reference)
            dvec_col = hat_d_col if freq == "low" else d_col
            dvec_pad = hat_d_pad if freq == "low" else d_pad
            fw, dfw = gcn_pre(h_gcn[freq], layer["gcn"], dvec_col)
            v = gcn_prop(A_pad, dfw, dvec_pad, _pad_rows(fw, n_pad),
                         layer["gcn"]["b"], skip_pad, freq, eps, tm, vmem_limit)
            h_gcn[freq] = batchnorm(v[:n])

    out = {}
    for freq in ("low", "high"):
        Z, X = decode(h_gat[freq], h_gcn[freq], params["dec"][freq],
                      params["dec"][freq + "_X"])
        out[freq + "_X"] = X
        out[freq + "_A"] = sigmoid_gram(Z, tm, n_pad, vmem_limit)
    return out


# --------------------------------------------------------------------------

if __name__ == "__main__":
    N, in_dim, hidden, heads, enc_layers, eps = 16, 8, 16, 2, 2, 0.3

    key = jax.random.PRNGKey(0)
    k_adj, k_feat, k_param = jax.random.split(key, 3)

    # Symmetric adjacency (no self-loops) with a ring to guarantee degree >= 2.
    upper = jnp.triu((jax.random.uniform(k_adj, (N, N)) < 0.3).astype(jnp.float32), k=1)
    A = upper + upper.T
    idx = jnp.arange(N)
    ring = jnp.zeros((N, N), jnp.float32).at[idx, (idx + 1) % N].set(1.0)
    A = jnp.clip(A + ring + ring.T, 0.0, 1.0)

    deg = A.sum(axis=1)
    d = 1.0 / jnp.sqrt(deg)          # g.ndata['d']
    hat_d = 1.0 / jnp.sqrt(deg + 1)  # g.ndata['hat_d']

    h = jax.random.normal(k_feat, (N, in_dim), dtype=jnp.float32)

    params = init_params(k_param, in_dim, hidden, heads, enc_layers)

    out = model_forward(params, A, d, hat_d, h, eps, heads, hidden)
    out = jax.block_until_ready(out)

    assert out["low_X"].shape == (N, in_dim)
    assert out["high_X"].shape == (N, in_dim)
    assert out["low_A"].shape == (N, N)
    assert out["high_A"].shape == (N, N)
    assert bool(jnp.all(jnp.isfinite(out["low_A"])))
    assert bool(jnp.all(jnp.isfinite(out["high_X"])))
    print("KERNEL_OK")
</pallas_src>

<mosaic_0001>
module attributes {stable_mosaic.version = 11 : i64} {
  func.func @_linear_kernel(%arg0: memref<16x8xf32, #tpu.memory_space<vmem>>, %arg1: memref<8x16xf32, #tpu.memory_space<vmem>>, %arg2: memref<1x16xf32, #tpu.memory_space<vmem>>, %arg3: memref<16x16xf32, #tpu.memory_space<vmem>>) attributes {dimension_semantics = [], scalar_prefetch = 0 : i64, scratch_operands = 0 : i64, tpu.core_type = #tpu.core_type<tc>} {
    %c0 = arith.constant 0 : index
    %c0_0 = arith.constant 0 : index
    %0 = vector.load %arg0[%c0, %c0_0] : memref<16x8xf32, #tpu.memory_space<vmem>>, vector<16x8xf32>
    %c0_1 = arith.constant 0 : index
    %c0_2 = arith.constant 0 : index
    %1 = vector.load %arg1[%c0_1, %c0_2] : memref<8x16xf32, #tpu.memory_space<vmem>>, vector<8x16xf32>
    %cst = arith.constant dense<0.000000e+00> : vector<16x16xf32>
    %2 = tpu.matmul %0, %1, %cst {dimension_numbers = #tpu.dot_dimension_numbers<[1], [0], [0], [1], [0, 0, 1, 1], [], []>} : vector<16x8xf32>, vector<8x16xf32>, vector<16x16xf32> -> vector<16x16xf32>
    %c0_3 = arith.constant 0 : index
    %c0_4 = arith.constant 0 : index
    %3 = vector.load %arg2[%c0_3, %c0_4] : memref<1x16xf32, #tpu.memory_space<vmem>>, vector<1x16xf32>
    %4 = vector.broadcast %3 : vector<1x16xf32> to vector<16x16xf32>
    %5 = arith.addf %2, %4 : vector<16x16xf32>
    %cst_5 = arith.constant 0.000000e+00 : f32
    %6 = vector.broadcast %cst_5 : f32 to vector<16x16xf32>
    %7 = arith.maximumf %5, %6 : vector<16x16xf32>
    %c0_6 = arith.constant 0 : index
    %c0_7 = arith.constant 0 : index
    %8 = vector.load %arg3[%c0_6, %c0_7] : memref<16x16xf32, #tpu.memory_space<vmem>>, vector<16x16xf32>
    tpu.vector_store %arg3[%c0_6, %c0_7], %7 {strides = array<i32>} : memref<16x16xf32, #tpu.memory_space<vmem>>, vector<16x16xf32>,
    return
  }
}

</mosaic_0001>

<llo_original>
// kernel: tpu_custom_call.1
$region0: #{tpu_custom_call.1}
  #allocation0 [shape = 'u32[]', space=smem, size = 0x4, offset = 0x4, fixed_abs, tag = 'smem constant byte address 0x4 - core index']
  #allocation1 [shape = 'u32[144,128]{1,0:T(1,128)}', space=vmem, size = 0x12000, scoped, tag = 'internal scratch']
  %s0 = inlined_call_operand.vmem [shape: f32[16,8], index: 0, kind: input, shape index: {}]
  %s1 = inlined_call_operand.vmem [shape: f32[8,16], index: 1, kind: input, shape index: {}]
  %s2 = inlined_call_operand.vmem [shape: f32[1,16], index: 2, kind: input, shape index: {}]
  %s3 = inlined_call_operand.hbm [shape: f32[16,16], index: 3, kind: output, shape index: {}]
  %s4 = sld [smem:[#allocation0]]
  $region22: #{tpu_custom_call.1} parent=0
    _
  %s6 = ssub.s32 1, %s4
  %s7 = scalar_select 0, %s6, %s4
  $region1: #{tpu_custom_call.1} parent=0
    #allocation2 [shape = 'u8[8192]{0}', space=vmem, size = 0x2000, scoped, tag = 'output window, operand 0, single buffered']
    #allocation3 [shape = 's32[1]{0}', space=sflag, size = 0x4, scoped, tag = 'scoped memory for tpu_custom_call.1']
    %8 = vsyncpa [#allocation3], 0
    // Predicated region
    $region2: #{tpu_custom_call.1} parent=1 // pred_check
      _
    $region3: #{tpu_custom_call.1} parent=1 // pred_check_branch
      %10 = sbr.rel (0) target = $region5
    $region4: #{tpu_custom_call.1} parent=1 // pred_region
      _
    $region5: #{tpu_custom_call.1} parent=1 // pred_fallthru
      _
    // Predicated region
    $region6: #{tpu_custom_call.1} parent=1 // pred_check
      _
    $region7: #{tpu_custom_call.1} parent=1 // pred_check_branch
      %12 = sbr.rel (0) target = $region9
    $region8: #{tpu_custom_call.1} parent=1 // pred_region
      _
    $region9: #{tpu_custom_call.1} parent=1 // pred_fallthru
      _
    // Predicated region
    $region10: #{tpu_custom_call.1} parent=1 // pred_check
      _
    $region11: #{tpu_custom_call.1} parent=1 // pred_check_branch
      %14 = sbr.rel (0) target = $region13
    $region12: #{tpu_custom_call.1} parent=1 // pred_region
      _
    $region13: #{tpu_custom_call.1} parent=1 // pred_fallthru
      _
    %v15 = vld [vmem:[%s0] sm:$0xff]
    %v16 = vld [vmem:[%s0 + $0x8] sm:$0xff]
    %v17 = vld [vmem:[%s1] sm:$0xff]
    %v18 = vld [vmem:[%s2] sm:$0x1]
    %v20 = vlaneseq
    %v21 = vshrl.u32 %v20, 7
    %v22 = vsub.s32 0, %v21
    %v23 = vrot.slane %v18, %v22
    %vm25 = vcmask 64512
    %v27 = vsel %vm25, %v15, 0
    %v30 = vsel %vm25, %v16, 0
    %32 = vmatprep.subr.mxu0 0.0
    %33 = vmatpush1.msra.mxu0 0.0
    %34 = vmatprep.subr.mxu0 0.0
    %35 = vmatpush1.msra.mxu0 0.0
    %36 = vmatprep.subr.mxu0 0.0
    %37 = vmatpush1.msra.mxu0 0.0
    %38 = vmatprep.subr.mxu0 0.0
    %39 = vmatpush1.msra.mxu0 0.0
    %40 = vmatprep.subr.mxu0 0.0
    %41 = vmatpush1.msra.mxu0 0.0
    %42 = vmatprep.subr.mxu0 0.0
    %43 = vmatpush1.msra.mxu0 0.0
    %44 = vmatprep.subr.mxu0 0.0
    %45 = vmatpush1.msra.mxu0 0.0
    %46 = vmatprep.subr.mxu0 0.0
    %47 = vmatpush1.msra.mxu0 0.0
    %48 = vmatprep.subr.mxu0 0.0
    %49 = vmatpush1.msra.mxu0 0.0
    %50 = vmatprep.subr.mxu0 0.0
    %51 = vmatpush1.msra.mxu0 0.0
    %52 = vmatprep.subr.mxu0 0.0
    %53 = vmatpush1.msra.mxu0 0.0
    %54 = vmatprep.subr.mxu0 0.0
    %55 = vmatpush1.msra.mxu0 0.0
    %56 = vmatprep.subr.mxu0 0.0
    %57 = vmatpush1.msra.mxu0 0.0
    %58 = vmatprep.subr.mxu0 0.0
    %59 = vmatpush1.msra.mxu0 0.0
    %60 = vmatprep.subr.mxu0 0.0
    %61 = vmatpush1.msra.mxu0 0.0
    %62 = vmatprep.subr.mxu0 0.0
    %63 = vmatpush1.msra.mxu0 %v17
    %64 = vmatprep.subr.mxu0 0.0
    %65 = vmatpush2.msra.mxu0 0.0
    %66 = vmatprep.subr.mxu0 0.0
    %67 = vmatpush2.msra.mxu0 0.0
    %68 = vmatprep.subr.mxu0 0.0
    %69 = vmatpush2.msra.mxu0 0.0
    %70 = vmatprep.subr.mxu0 0.0
    %71 = vmatpush2.msra.mxu0 0.0
    %72 = vmatprep.subr.mxu0 0.0
    %73 = vmatpush2.msra.mxu0 0.0
    %74 = vmatprep.subr.mxu0 0.0
    %75 = vmatpush2.msra.mxu0 0.0
    %76 = vmatprep.subr.mxu0 0.0
    %77 = vmatpush2.msra.mxu0 0.0
    %78 = vmatprep.subr.mxu0 0.0
    %79 = vmatpush2.msra.mxu0 0.0
    %80 = vmatprep.subr.mxu0 0.0
    %81 = vmatpush2.msra.mxu0 0.0
    %82 = vmatprep.subr.mxu0 0.0
    %83 = vmatpush2.msra.mxu0 0.0
    %84 = vmatprep.subr.mxu0 0.0
    %85 = vmatpush2.msra.mxu0 0.0
    %86 = vmatprep.subr.mxu0 0.0
    %87 = vmatpush2.msra.mxu0 0.0
    %88 = vmatprep.subr.mxu0 0.0
    %89 = vmatpush2.msra.mxu0 0.0
    %90 = vmatprep.subr.mxu0 0.0
    %91 = vmatpush2.msra.mxu0 0.0
    %92 = vmatprep.subr.mxu0 0.0
    %93 = vmatpush2.msra.mxu0 0.0
    %94 = vmatprep.subr.mxu0 0.0
    %95 = vmatpush2.msra.mxu0 0.0
    %96 = vmatprep.mubr.f32.mxu0 0.0
    %97 = vmatmul.mubr.f32.gmra.mxu0 %v27
    %v98 = vpop.f32.mrf.mxu0
    %v99 = vadd.f32 %v23, %v98
    %v100 = vpop.f32.mrf.mxu0
    %101 = vmatprep.mubr.f32.mxu0 0.0
    %102 = vmatmul.mubr.f32.gmra.mxu0 %v30
    %v103 = vpop.f32.mrf.mxu0
    %v104 = vadd.f32 %v23, %v103
    %v105 = vpop.f32.mrf.mxu0
    %106 = vdwg.mxu0
    %v107 = vmax.f32 %v99, 0.0
    %v108 = vmax.f32 %v104, 0.0
    %vm109 = vcmask 130048
    %110 = vst.msk [vmem:[#allocation2] sm:$0xff] %vm109, %v107
    %111 = vst.msk [vmem:[#allocation2 + $0x8] sm:$0xff] %vm109, %v108
    // Predicated region
    $region14: #{tpu_custom_call.1} parent=1 // pred_check
      _
    $region15: #{tpu_custom_call.1} parent=1 // pred_check_branch
      %113 = sbr.rel (0) target = $region17
    $region16: #{tpu_custom_call.1} parent=1 // pred_region
      %s115 = ssub.s32 256, 256
      %116 = vsyncadd [#allocation3], %s115
      %s117 = sshll.u32 [#allocation2], 4
      %s118 = int_to_ptr.vmem [resolvable:$true] %s117
      %123 = dma.vmem_to_hbm [thread:$0]  %s118, 256, %s3, [#allocation3], 128, 128, 8
    $region17: #{tpu_custom_call.1} parent=1 // pred_fallthru
      _
    // Predicated region
    $region18: #{tpu_custom_call.1} parent=1 // pred_check
      _
    $region19: #{tpu_custom_call.1} parent=1 // pred_check_branch
      %125 = sbr.rel (0) target = $region21
    $region20: #{tpu_custom_call.1} parent=1 // pred_region
      %126 = dma.done [#allocation3], 256
    $region21: #{tpu_custom_call.1} parent=1 // pred_fallthru
      _
    %127 = vsyncpa [#allocation3], 1

</llo_original>
